<compile_context>
chip_gen: v5e
topology: v5e:2x2
jax: 0.10.0
libtpu: 0.0.40
codegen_flags: <defaults>
</compile_context>

<pallas_src>
import functools
import numpy as np
import jax
import jax.numpy as jnp
from jax.experimental import pallas as pl
from jax.experimental.pallas import tpu as pltpu


def _round_up(v, m):
    return (v + m - 1) // m * m


def _s2t_kernel(x_ref, mask_ref, w1_ref, params_ref, b2_ref, out_ref):
    tb, n, d = x_ref.shape
    l = w1_ref.shape[1]
    dpack = out_ref.shape[1]

    p = params_ref[...]                                # (8, L) f32 param slab
    b1, gamma, beta, w2row = p[0:1], p[1:2], p[2:3], p[3:4]

    x3 = x_ref[...]                                    # (TB, N, D) bf16
    xf = x3.reshape(tb * n, d)                         # pure sublane merge (N % 8 == 0)

    # fc1 on the MXU: bf16 inputs, f32 accumulate.
    h = jnp.dot(xf, w1_ref[...], preferred_element_type=jnp.float32)
    h = h + b1                                         # (TB*N, L)

    # One-pass LayerNorm stats (biased variance, eps matches nn.LayerNorm).
    inv_l = 1.0 / l
    mu = jnp.sum(h, axis=-1, keepdims=True) * inv_l
    var = jnp.sum(h * h, axis=-1, keepdims=True) * inv_l - mu * mu
    inv = jax.lax.rsqrt(var + 1e-5)
    # TODO(synk): on v6e/v7x this elementwise/tanh chain (the VALU/EUP hot path)
    # could run in bf16 for ~2x; kept f32 so v5e (no bf16 VPU/EUP) is not hurt.
    a = jnp.tanh((h - mu) * inv * gamma + beta)        # (TB*N, L)

    # fc2 (output width 1): VPU multiply + XLU lane reduce, not an MXU matmul.
    logits = jnp.sum(a * w2row, axis=-1, keepdims=True)      # (TB*N, 1)
    logits = logits.reshape(tb, n) + b2_ref[0]                # (TB, N)
    logits = logits + mask_ref[...]                           # -1e30 on padded tokens

    # Softmax over the token axis (dim=1 in PyTorch); divide via EUP reciprocal.
    m = jnp.max(logits, axis=-1, keepdims=True)
    e = jnp.exp(logits - m)
    att = e * pl.reciprocal(jnp.sum(e, axis=-1, keepdims=True), approx=True)

    # Attention-weighted token sum: broadcast-multiply + sublane reduce.
    outv = jnp.sum(att[:, :, None] * x3.astype(jnp.float32), axis=1)   # (TB, D)

    # Lane-dense packed store: [out | att | zero-tail] as one (TB, dpack) slab.
    parts = [outv, att]
    tail = dpack - d - n
    if tail:
        parts.append(jnp.zeros((tb, tail), jnp.float32))
    out_ref[...] = jnp.concatenate(parts, axis=-1)


def _pick_tb(batch, n_pad, d, l, dpack, g):
    # Per-batch-row VMEM bytes: bf16 x (double-buffered), f32 packed output
    # (double-buffered), plus ~4 live f32 (N, L) intermediates (h / a / temps).
    per_row = 2 * n_pad * d * 2 + 2 * dpack * 4 + 4 * n_pad * l * 4
    budget = 32 << 20          # conservative working-set cap (v7x: 64 MiB VMEM/TC)
    tb = max(8, min(512, (budget // per_row) // 8 * 8))
    b8 = _round_up(batch, 8)
    tb = min(tb, b8)
    # Keep at least two grid steps overall so the pipeline / both v7x TCs get work.
    if g * ((b8 + tb - 1) // tb) < 2 and b8 >= 16:
        tb = _round_up((b8 + 1) // 2, 8)
    return tb


@functools.partial(jax.jit, static_argnames=("tb", "dpack"))
def _s2t_call(x_groups, mask_add, w1, params, b2, *, tb, dpack):
    g, bp, n, d = x_groups.shape
    l = w1.shape[1]
    grid = (g, bp // tb)
    return pl.pallas_call(
        _s2t_kernel,
        out_shape=jax.ShapeDtypeStruct((g, bp, dpack), jnp.float32),
        grid=grid,
        in_specs=[
            pl.BlockSpec((None, tb, n, d), lambda gi, bi: (gi, bi, 0, 0)),  # x
            pl.BlockSpec((None, 1, n), lambda gi, bi: (gi, 0, 0)),          # logit mask
            pl.BlockSpec((d, l), lambda gi, bi: (0, 0)),                    # W1 (in,out)
            pl.BlockSpec((8, l), lambda gi, bi: (0, 0)),                    # b1/gamma/beta/w2
            pl.BlockSpec(memory_space=pltpu.MemorySpace.SMEM),              # b2 scalar
        ],
        out_specs=pl.BlockSpec((None, tb, dpack), lambda gi, bi: (gi, bi, 0)),
        compiler_params=pltpu.CompilerParams(
            dimension_semantics=("parallel", "parallel"),
            vmem_limit_bytes=48 * 1024 * 1024),
    )(x_groups, mask_add, w1, params, b2)


def inter_propagation_source2token(x, indicator, w1, b1, gamma, beta, w2, b2,
                                   return_attention_weights=False):
    """x: (B, N_total, D); indicator: iterable of 0/1 masks over the token axis.

    w1: (D, 4D) pre-transposed; w2: (4D, 1) or (4D,).  Returns (B, G, D) and,
    optionally, a list of per-group attention weights (B, Ng).
    """
    B, _, D = x.shape
    L = w1.shape[1]

    # TODO(synk): the boolean-mask token gather is data-dependent in size, so the
    # per-group selection is done with XLA gathers outside the kernel; all groups
    # are padded to one common (masked) token count and fused into ONE pallas_call.
    groups = [np.nonzero(np.asarray(m) == 1)[0] for m in indicator]
    G = len(groups)
    n_pad = _round_up(max(max(len(g) for g in groups), 8), 8)

    xg_list, mask_rows = [], []
    for idx in groups:
        xg = jnp.take(x, jnp.asarray(idx, dtype=jnp.int32), axis=1)   # (B, Ng, D)
        ng = len(idx)
        if ng < n_pad:
            xg = jnp.pad(xg, ((0, 0), (0, n_pad - ng), (0, 0)))
        xg_list.append(xg)
        row = np.zeros((n_pad,), np.float32)
        row[ng:] = -1e30                     # padded tokens get ~ -inf logits
        mask_rows.append(row)
    x_groups = jnp.stack(xg_list, axis=0)                       # (G, B, Np, D)
    mask_add = jnp.asarray(np.stack(mask_rows))[:, None, :]     # (G, 1, Np)

    dpack = _round_up(D + n_pad, 128)
    tb = _pick_tb(B, n_pad, D, L, dpack, G)
    bp = _round_up(B, tb)
    if bp != B:
        # Zero batch-padding rows never mix with real rows; sliced off below.
        x_groups = jnp.pad(x_groups, ((0, 0), (0, bp - B), (0, 0), (0, 0)))

    params = (jnp.zeros((8, L), jnp.float32)
              .at[0].set(jnp.reshape(b1, (L,)).astype(jnp.float32))
              .at[1].set(jnp.reshape(gamma, (L,)).astype(jnp.float32))
              .at[2].set(jnp.reshape(beta, (L,)).astype(jnp.float32))
              .at[3].set(jnp.reshape(w2, (L,)).astype(jnp.float32)))

    packed = _s2t_call(
        x_groups.astype(jnp.bfloat16),
        mask_add,
        w1.astype(jnp.bfloat16),
        params,
        jnp.reshape(b2, (1,)).astype(jnp.float32),
        tb=tb, dpack=dpack)                                     # (G, bp, dpack)

    out = jnp.transpose(packed[:, :B, :D], (1, 0, 2))           # (B, G, D)
    if return_attention_weights:
        atts = [packed[g, :B, D:D + len(groups[g])] for g in range(G)]
        return out, atts
    return out


def _source2token_ref(x, w1, b1, gamma, beta, w2, b2):
    h = jnp.einsum("bnd,dl->bnl", x, w1) + b1
    mu = jnp.mean(h, axis=-1, keepdims=True)
    var = jnp.mean((h - mu) ** 2, axis=-1, keepdims=True)
    hn = (h - mu) / jnp.sqrt(var + 1e-5) * gamma + beta
    a = jnp.tanh(hn)
    s = jnp.einsum("bnl,l->bn", a, jnp.reshape(w2, (-1,))) + b2[0]
    att = jax.nn.softmax(s, axis=1)
    out = jnp.sum(att[:, :, None] * x, axis=1)
    return out, att


if __name__ == "__main__":
    B, N_total, d_h = 2, 16, 32
    latent = d_h * 4

    key = jax.random.PRNGKey(0)
    kx, k1, k2, k3, k4 = jax.random.split(key, 5)

    x = jax.random.normal(kx, (B, N_total, d_h), dtype=jnp.float32)

    # Two token groups (rep_masks over the token axis), 8 tokens each.
    indicator = np.zeros((2, N_total), dtype=np.int32)
    indicator[0, 0::2] = 1
    indicator[1, 1::2] = 1

    # Deterministic PyTorch-style Linear init (uniform +-1/sqrt(fan_in)),
    # weights stored pre-transposed as (in_features, out_features).
    lim1 = 1.0 / np.sqrt(d_h)
    w1 = jax.random.uniform(k1, (d_h, latent), jnp.float32, -lim1, lim1)
    b1 = jax.random.uniform(k2, (latent,), jnp.float32, -lim1, lim1)
    lim2 = 1.0 / np.sqrt(latent)
    w2 = jax.random.uniform(k3, (latent, 1), jnp.float32, -lim2, lim2)
    b2 = jax.random.uniform(k4, (1,), jnp.float32, -lim2, lim2)
    gamma = jnp.ones((latent,), jnp.float32)
    beta = jnp.zeros((latent,), jnp.float32)

    out, att_list = inter_propagation_source2token(
        x, indicator, w1, b1, gamma, beta, w2, b2,
        return_attention_weights=True)
    out = jax.block_until_ready(out)
    att_list = [jax.block_until_ready(a) for a in att_list]

    # Reference (pure JAX f32, mirrors the PyTorch forward).
    ref_outs, ref_atts = [], []
    for rep_mask in indicator:
        idx = np.nonzero(rep_mask == 1)[0]
        ro, ra = _source2token_ref(x[:, idx, :], w1, b1, gamma, beta, w2, b2)
        ref_outs.append(ro)
        ref_atts.append(ra)
    ref_out = jnp.stack(ref_outs, axis=1)

    assert out.shape == (B, indicator.shape[0], d_h)
    # Tolerance loosened vs the f32 reference because the kernel runs the fc1
    # GEMM (and streams x) in bf16 and uses the approx EUP reciprocal.
    assert jnp.allclose(out, ref_out, atol=3e-2, rtol=3e-2)
    for a, ra in zip(att_list, ref_atts):
        assert a.shape == ra.shape
        assert jnp.allclose(a, ra, atol=3e-2, rtol=3e-2)

    print("KERNEL_OK")
</pallas_src>

<mosaic_0001>
module attributes {stable_mosaic.version = 11 : i64} {
  func.func @_s2t_kernel(%arg0: i32, %arg1: i32, %arg2: memref<1x8x8x32xbf16, #tpu.memory_space<vmem>>, %arg3: memref<1x1x8xf32, #tpu.memory_space<vmem>>, %arg4: memref<32x128xbf16, #tpu.memory_space<vmem>>, %arg5: memref<8x128xf32, #tpu.memory_space<vmem>>, %arg6: memref<1xf32, #tpu.memory_space<smem>>, %arg7: memref<1x8x128xf32, #tpu.memory_space<vmem>>) attributes {dimension_semantics = [#tpu.dimension_semantics<parallel>, #tpu.dimension_semantics<parallel>], iteration_bounds = array<i64: 2, 1>, scalar_prefetch = 0 : i64, scratch_operands = 0 : i64, tpu.core_type = #tpu.core_type<tc>, window_params = [{transform_indices = @transform_0, window_bounds = array<i64: 1, 8, 8, 32>}, {transform_indices = @transform_1, window_bounds = array<i64: 1, 1, 8>}, {pipeline_mode = #tpu.pipeline_mode<synchronous>, transform_indices = @transform_2, window_bounds = array<i64: 32, 128>}, {pipeline_mode = #tpu.pipeline_mode<synchronous>, transform_indices = @transform_3, window_bounds = array<i64: 8, 128>}, {transform_indices = @transform_4, window_bounds = array<i64: 1>}, {transform_indices = @transform_5, window_bounds = array<i64: 1, 8, 128>}]} {
    %c0 = arith.constant 0 : index
    %c0_0 = arith.constant 0 : index
    %0 = vector.load %arg5[%c0, %c0_0] : memref<8x128xf32, #tpu.memory_space<vmem>>, vector<8x128xf32>
    %1 = vector.extract_strided_slice %0 {offsets = [0, 0], sizes = [1, 128], strides = [1, 1]} : vector<8x128xf32> to vector<1x128xf32>
    %2 = vector.extract_strided_slice %0 {offsets = [1, 0], sizes = [1, 128], strides = [1, 1]} : vector<8x128xf32> to vector<1x128xf32>
    %3 = vector.extract_strided_slice %0 {offsets = [2, 0], sizes = [1, 128], strides = [1, 1]} : vector<8x128xf32> to vector<1x128xf32>
    %4 = vector.extract_strided_slice %0 {offsets = [3, 0], sizes = [1, 128], strides = [1, 1]} : vector<8x128xf32> to vector<1x128xf32>
    %c0_1 = arith.constant 0 : index
    %c0_2 = arith.constant 0 : index
    %c0_3 = arith.constant 0 : index
    %c0_4 = arith.constant 0 : index
    %5 = vector.load %arg2[%c0_1, %c0_2, %c0_3, %c0_4] : memref<1x8x8x32xbf16, #tpu.memory_space<vmem>>, vector<1x8x8x32xbf16>
    %6 = vector.shape_cast %5 : vector<1x8x8x32xbf16> to vector<8x8x32xbf16>
    %7 = vector.shape_cast %6 : vector<8x8x32xbf16> to vector<64x32xbf16>
    %c0_5 = arith.constant 0 : index
    %c0_6 = arith.constant 0 : index
    %8 = vector.load %arg4[%c0_5, %c0_6] : memref<32x128xbf16, #tpu.memory_space<vmem>>, vector<32x128xbf16>
    %cst = arith.constant dense<0.000000e+00> : vector<64x128xf32>
    %9 = tpu.matmul %7, %8, %cst {dimension_numbers = #tpu.dot_dimension_numbers<[1], [0], [0], [1], [0, 0, 1, 1], [], []>} : vector<64x32xbf16>, vector<32x128xbf16>, vector<64x128xf32> -> vector<64x128xf32>
    %10 = vector.broadcast %1 : vector<1x128xf32> to vector<64x128xf32>
    %11 = arith.addf %9, %10 : vector<64x128xf32>
    %cst_7 = arith.constant dense<0.000000e+00> : vector<64xf32>
    %12 = vector.multi_reduction <add>, %11, %cst_7 [1] : vector<64x128xf32> to vector<64xf32>
    %13 = vector.shape_cast %12 : vector<64xf32> to vector<64x1xf32>
    %cst_8 = arith.constant 7.812500e-03 : f32
    %14 = vector.broadcast %cst_8 : f32 to vector<64x1xf32>
    %15 = arith.mulf %13, %14 : vector<64x1xf32>
    %16 = arith.mulf %11, %11 : vector<64x128xf32>
    %cst_9 = arith.constant dense<0.000000e+00> : vector<64xf32>
    %17 = vector.multi_reduction <add>, %16, %cst_9 [1] : vector<64x128xf32> to vector<64xf32>
    %18 = vector.shape_cast %17 : vector<64xf32> to vector<64x1xf32>
    %cst_10 = arith.constant 7.812500e-03 : f32
    %19 = vector.broadcast %cst_10 : f32 to vector<64x1xf32>
    %20 = arith.mulf %18, %19 : vector<64x1xf32>
    %21 = arith.mulf %15, %15 : vector<64x1xf32>
    %22 = arith.subf %20, %21 : vector<64x1xf32>
    %cst_11 = arith.constant 9.99999974E-6 : f32
    %23 = vector.broadcast %cst_11 : f32 to vector<64x1xf32>
    %24 = arith.addf %22, %23 : vector<64x1xf32>
    %25 = math.rsqrt %24 : vector<64x1xf32>
    %26 = vector.broadcast %15 : vector<64x1xf32> to vector<64x128xf32>
    %27 = arith.subf %11, %26 : vector<64x128xf32>
    %28 = vector.broadcast %25 : vector<64x1xf32> to vector<64x128xf32>
    %29 = arith.mulf %27, %28 : vector<64x128xf32>
    %30 = vector.broadcast %2 : vector<1x128xf32> to vector<64x128xf32>
    %31 = arith.mulf %29, %30 : vector<64x128xf32>
    %32 = vector.broadcast %3 : vector<1x128xf32> to vector<64x128xf32>
    %33 = arith.addf %31, %32 : vector<64x128xf32>
    %34 = math.tanh %33 : vector<64x128xf32>
    %35 = vector.broadcast %4 : vector<1x128xf32> to vector<64x128xf32>
    %36 = arith.mulf %34, %35 : vector<64x128xf32>
    %cst_12 = arith.constant dense<0.000000e+00> : vector<64xf32>
    %37 = vector.multi_reduction <add>, %36, %cst_12 [1] : vector<64x128xf32> to vector<64xf32>
    %38 = vector.shape_cast %37 : vector<64xf32> to vector<64x1xf32>
    %39 = vector.shape_cast %38 : vector<64x1xf32> to vector<8x8xf32>
    %c0_13 = arith.constant 0 : index
    %40 = memref.load %arg6[%c0_13] : memref<1xf32, #tpu.memory_space<smem>>
    %41 = vector.broadcast %40 : f32 to vector<8x8xf32>
    %42 = arith.addf %39, %41 : vector<8x8xf32>
    %c0_14 = arith.constant 0 : index
    %c0_15 = arith.constant 0 : index
    %c0_16 = arith.constant 0 : index
    %43 = vector.load %arg3[%c0_14, %c0_15, %c0_16] : memref<1x1x8xf32, #tpu.memory_space<vmem>>, vector<1x1x8xf32>
    %44 = vector.shape_cast %43 : vector<1x1x8xf32> to vector<1x8xf32>
    %45 = vector.broadcast %44 : vector<1x8xf32> to vector<8x8xf32>
    %46 = arith.addf %42, %45 : vector<8x8xf32>
    %cst_17 = arith.constant dense<0xFF800000> : vector<8xf32>
    %47 = vector.multi_reduction <maximumf>, %46, %cst_17 [1] : vector<8x8xf32> to vector<8xf32>
    %48 = vector.shape_cast %47 : vector<8xf32> to vector<8x1xf32>
    %49 = vector.broadcast %48 : vector<8x1xf32> to vector<8x8xf32>
    %50 = arith.subf %46, %49 : vector<8x8xf32>
    %51 = math.exp %50 : vector<8x8xf32>
    %cst_18 = arith.constant dense<0.000000e+00> : vector<8xf32>
    %52 = vector.multi_reduction <add>, %51, %cst_18 [1] : vector<8x8xf32> to vector<8xf32>
    %53 = vector.shape_cast %52 : vector<8xf32> to vector<8x1xf32>
    %54 = tpu.reciprocal %53 {approx = true} : vector<8x1xf32> -> vector<8x1xf32>
    %55 = vector.broadcast %54 : vector<8x1xf32> to vector<8x8xf32>
    %56 = arith.mulf %51, %55 : vector<8x8xf32>
    %57 = vector.shape_cast %56 : vector<8x8xf32> to vector<8x8x1xf32>
    %58 = arith.extf %6 : vector<8x8x32xbf16> to vector<8x8x32xf32>
    %59 = vector.broadcast %57 : vector<8x8x1xf32> to vector<8x8x32xf32>
    %60 = arith.mulf %59, %58 : vector<8x8x32xf32>
    %cst_19 = arith.constant dense<0.000000e+00> : vector<8x32xf32>
    %61 = vector.multi_reduction <add>, %60, %cst_19 [1] : vector<8x8x32xf32> to vector<8x32xf32>
    %cst_20 = arith.constant 0.000000e+00 : f32
    %62 = vector.broadcast %cst_20 : f32 to vector<8x88xf32>
    %63 = tpu.concatenate %61, %56, %62 in 1 : vector<8x32xf32>, vector<8x8xf32>, vector<8x88xf32> -> vector<8x128xf32>
    %c0_21 = arith.constant 0 : index
    %c0_22 = arith.constant 0 : index
    %c0_23 = arith.constant 0 : index
    %64 = vector.load %arg7[%c0_21, %c0_22, %c0_23] : memref<1x8x128xf32, #tpu.memory_space<vmem>>, vector<1x8x128xf32>
    %65 = vector.shape_cast %64 : vector<1x8x128xf32> to vector<8x128xf32>
    %66 = vector.shape_cast %63 : vector<8x128xf32> to vector<1x8x128xf32>
    tpu.vector_store %arg7[%c0_21, %c0_22, %c0_23], %66 {strides = array<i32>} : memref<1x8x128xf32, #tpu.memory_space<vmem>>, vector<1x8x128xf32>,
    return
  }
  func.func @transform_0(%arg0: i32, %arg1: i32) -> (i32, i32, i32, i32) {
    %c0_i32 = arith.constant 0 : i32
    %c0_i32_0 = arith.constant 0 : i32
    %c0_i32_1 = arith.constant 0 : i32
    return %arg0, %arg1, %c0_i32, %c0_i32_0 : i32, i32, i32, i32
  }
  func.func @transform_1(%arg0: i32, %arg1: i32) -> (i32, i32, i32) {
    %c0_i32 = arith.constant 0 : i32
    %c0_i32_0 = arith.constant 0 : i32
    %c0_i32_1 = arith.constant 0 : i32
    return %arg0, %c0_i32, %c0_i32_0 : i32, i32, i32
  }
  func.func @transform_2(%arg0: i32, %arg1: i32) -> (i32, i32) {
    %c0_i32 = arith.constant 0 : i32
    %c0_i32_0 = arith.constant 0 : i32
    %c0_i32_1 = arith.constant 0 : i32
    return %c0_i32, %c0_i32_0 : i32, i32
  }
  func.func @transform_3(%arg0: i32, %arg1: i32) -> (i32, i32) {
    %c0_i32 = arith.constant 0 : i32
    %c0_i32_0 = arith.constant 0 : i32
    %c0_i32_1 = arith.constant 0 : i32
    return %c0_i32, %c0_i32_0 : i32, i32
  }
  func.func @transform_4(%arg0: i32, %arg1: i32) -> i32 {
    %c0_i32 = arith.constant 0 : i32
    %c0_i32_0 = arith.constant 0 : i32
    return %c0_i32 : i32
  }
  func.func @transform_5(%arg0: i32, %arg1: i32) -> (i32, i32, i32) {
    %c0_i32 = arith.constant 0 : i32
    %c0_i32_0 = arith.constant 0 : i32
    return %arg0, %arg1, %c0_i32 : i32, i32, i32
  }
}

</mosaic_0001>

<llo_original>
// kernel: _s2t_call.1
$region0: #{_s2t_call.1}
  #allocation0 [shape = 'u32[]', space=smem, size = 0x4, offset = 0x4, fixed_abs, tag = 'smem constant byte address 0x4 - core index']
  #allocation1 [shape = 'u32[72,128]{1,0:T(1,128)}', space=vmem, size = 0x9000, scoped, tag = 'internal scratch']
  #allocation2 [shape = 'f32[1]{0:T(128)S(6)}', space=smem, size = 0x200, scoped, tag = 'scoped memory for _s2t_call.1']
  %s0 = inlined_call_operand.hbm [shape: bf16[2,8,8,32], index: 0, kind: input, shape index: {}]
  %s1 = inlined_call_operand.vmem [shape: f32[2,1,8], index: 1, kind: input, shape index: {}]
  %s2 = inlined_call_operand.hbm [shape: bf16[32,128], index: 2, kind: input, shape index: {}]
  %s3 = inlined_call_operand.hbm [shape: f32[8,128], index: 3, kind: input, shape index: {}]
  %s4 = inlined_call_operand.<no memory space> [shape: f32[1], index: 4, kind: input, shape index: {}]
  %s5 = inlined_call_operand.hbm [shape: f32[2,8,128], index: 5, kind: output, shape index: {}]
  %s6 = sld [smem:[#allocation0]]
  $region65: #{_s2t_call.1} parent=0
    _
  %s8 = ssub.s32 1, %s6
  %s9 = scalar_select 0, %s8, %s6
  %10 = sst [smem:[#allocation2]] %s4
  $region1: #{_s2t_call.1} parent=0
    #allocation3 [shape = 'u8[32768]{0}', space=vmem, size = 0x8000, scoped, tag = 'input window, operand 0']
    #allocation4 [shape = 's32[2]{0}', space=sflag, size = 0x8, scoped, tag = 'scoped memory for _s2t_call.1']
    #allocation5 [shape = 's32[2]{0}', space=sflag, size = 0x8, scoped, tag = 'scoped memory for _s2t_call.1']
    #allocation6 [shape = 'u8[8192]{0}', space=vmem, size = 0x2000, scoped, tag = 'input window, operand 2, single buffered']
    #allocation7 [shape = 's32[1]{0}', space=sflag, size = 0x4, scoped, tag = 'scoped memory for _s2t_call.1']
    #allocation8 [shape = 'u8[4096]{0}', space=vmem, size = 0x1000, scoped, tag = 'input window, operand 3, single buffered']
    #allocation9 [shape = 'u8[8192]{0}', space=vmem, size = 0x2000, scoped, tag = 'output window, operand 0']
    %11 = vsyncpa [#allocation4], 0
    %s12 = scalar_lea.sflag [#allocation4], 1
    %13 = vsyncpa %s12, 0
    %14 = vsyncpa [#allocation7], 0
    %15 = vsyncpa [#allocation5], 0
    %s16 = scalar_lea.sflag [#allocation5], 1
    %17 = vsyncpa %s16, 0
    loop: start=0, step=1, limit=4
    $region2: #{_s2t_call.1} parent=1 // loop_pre_header
      _
    $region3: #{_s2t_call.1} parent=1 // loop_header
      %s19 = sphi 0, %s23
      %p20 = scmp.ge.s32.totalorder %s19, 4
      %s26 = sphi 0, %s38
      %s27 = sphi 0, %s34
      %s28 = sphi 0, %s26
      %s29 = sphi 0, %s27
      %s30 = sphi 0, %s28
      %s31 = sphi 0, %s29
      %s43 = sphi 0, %s45
      %s46 = sphi 0, %s43
      %s47 = sphi 0, %s46
      %s63 = sphi 0, %s47
      %s69 = sphi 0, %s71
      %s72 = sphi 0, %s69
      %s73 = sphi 0, %s72
      %s89 = sphi 0, %s73
      %s93 = sphi 0, %s93
      %s95 = sphi 0, %s93
      %s96 = sphi 0, %s95
      %s110 = sphi 0, %s96
      %s114 = sphi 0, %s114
      %s116 = sphi 0, %s114
      %s117 = sphi 0, %s116
      %s131 = sphi 0, %s117
      %s135 = sphi 0, %s135
      %s137 = sphi 0, %s135
      %s138 = sphi 0, %s137
      %s152 = sphi 0, %s138
      %s160 = sphi 0, %s162
      %s163 = sphi 0, %s160
      %s164 = sphi 0, %s163
      %s180 = sphi 0, %s164
    $region4: #{_s2t_call.1} parent=1 // loop_header_branch
      %22 = sbr.rel (%p20) target = $region8
    $region5: #{_s2t_call.1} parent=1 // loop_body
      %s24 = ssub.s32 %s19, 1
      %s25 = ssub.s32 %s19, 2
      %s32 = sadd.s32 1, %s27
      %p33 = scmp.ge.s32.totalorder %s32, 1
      %s34 = scalar_select %p33, 0, %s32
      %s35 = sadd.s32 1, %s26
      %s36 = scalar_select %p33, %s35, %s26
      %p37 = scmp.ge.s32.totalorder %s36, 2
      %s38 = scalar_select %p37, 0, %s36
      %s39 = ssub.s32 %s26, %s38
      %s40 = ssub.s32 %s27, %s34
      %s41 = sor.u32 %s39, %s40
      %p42 = scmp.eq.s32.totalorder %s41, 0
      %s44 = sadd.s32 %s43, 1
      %s45 = scalar_select %p42, %s43, %s44
      %p48 = pneg %p42
      %p49 = scmp.eq.s32.totalorder %s19, 1
      %p50 = por %p48, %p49
      %p51 = scmp.ne.s32.totalorder %s43, %s46
      %p52 = scmp.eq.s32.totalorder %s19, 0
      %p53 = por %p51, %p52
      %p54 = scmp.ne.s32.totalorder %s43, %s46
      %p55 = scmp.eq.s32.totalorder %s24, 1
      %p56 = por %p54, %p55
      %p57 = scmp.ne.s32.totalorder %s46, %s47
      %p58 = scmp.eq.s32.totalorder %s24, 0
      %p59 = por %p57, %p58
      %p60 = scmp.ne.s32.totalorder %s46, %s47
      %p61 = scmp.eq.s32.totalorder %s25, 1
      %p62 = por %p60, %p61
      %p64 = scmp.ne.s32.totalorder %s47, %s63
      %p65 = scmp.eq.s32.totalorder %s25, 0
      %p66 = por %p64, %p65
      %s67 = ssub.s32 %s26, %s38
      %p68 = scmp.eq.s32.totalorder %s67, 0
      %s70 = sadd.s32 %s69, 1
      %s71 = scalar_select %p68, %s69, %s70
      %p74 = pneg %p68
      %p75 = scmp.eq.s32.totalorder %s19, 1
      %p76 = por %p74, %p75
      %p77 = scmp.ne.s32.totalorder %s69, %s72
      %p78 = scmp.eq.s32.totalorder %s19, 0
      %p79 = por %p77, %p78
      %p80 = scmp.ne.s32.totalorder %s69, %s72
      %p81 = scmp.eq.s32.totalorder %s24, 1
      %p82 = por %p80, %p81
      %p83 = scmp.ne.s32.totalorder %s72, %s73
      %p84 = scmp.eq.s32.totalorder %s24, 0
      %p85 = por %p83, %p84
      %p86 = scmp.ne.s32.totalorder %s72, %s73
      %p87 = scmp.eq.s32.totalorder %s25, 1
      %p88 = por %p86, %p87
      %p90 = scmp.ne.s32.totalorder %s73, %s89
      %p91 = scmp.eq.s32.totalorder %s25, 0
      %p92 = por %p90, %p91
      %s94 = sadd.s32 %s93, 1
      %p97 = scmp.eq.s32.totalorder %s19, 1
      %p98 = scmp.ne.s32.totalorder %s93, %s95
      %p99 = scmp.eq.s32.totalorder %s19, 0
      %p100 = por %p98, %p99
      %p101 = scmp.ne.s32.totalorder %s93, %s95
      %p102 = scmp.eq.s32.totalorder %s24, 1
      %p103 = por %p101, %p102
      %p104 = scmp.ne.s32.totalorder %s95, %s96
      %p105 = scmp.eq.s32.totalorder %s24, 0
      %p106 = por %p104, %p105
      %p107 = scmp.ne.s32.totalorder %s95, %s96
      %p108 = scmp.eq.s32.totalorder %s25, 1
      %p109 = por %p107, %p108
      %p111 = scmp.ne.s32.totalorder %s96, %s110
      %p112 = scmp.eq.s32.totalorder %s25, 0
      %p113 = por %p111, %p112
      %s115 = sadd.s32 %s114, 1
      %p118 = scmp.eq.s32.totalorder %s19, 1
      %p119 = scmp.ne.s32.totalorder %s114, %s116
      %p120 = scmp.eq.s32.totalorder %s19, 0
      %p121 = por %p119, %p120
      %p122 = scmp.ne.s32.totalorder %s114, %s116
      %p123 = scmp.eq.s32.totalorder %s24, 1
      %p124 = por %p122, %p123
      %p125 = scmp.ne.s32.totalorder %s116, %s117
      %p126 = scmp.eq.s32.totalorder %s24, 0
      %p127 = por %p125, %p126
      %p128 = scmp.ne.s32.totalorder %s116, %s117
      %p129 = scmp.eq.s32.totalorder %s25, 1
      %p130 = por %p128, %p129
      %p132 = scmp.ne.s32.totalorder %s117, %s131
      %p133 = scmp.eq.s32.totalorder %s25, 0
      %p134 = por %p132, %p133
      %s136 = sadd.s32 %s135, 1
      %p139 = scmp.eq.s32.totalorder %s19, 1
      %p140 = scmp.ne.s32.totalorder %s135, %s137
      %p141 = scmp.eq.s32.totalorder %s19, 0
      %p142 = por %p140, %p141
      %p143 = scmp.ne.s32.totalorder %s135, %s137
      %p144 = scmp.eq.s32.totalorder %s24, 1
      %p145 = por %p143, %p144
      %p146 = scmp.ne.s32.totalorder %s137, %s138
      %p147 = scmp.eq.s32.totalorder %s24, 0
      %p148 = por %p146, %p147
      %p149 = scmp.ne.s32.totalorder %s137, %s138
      %p150 = scmp.eq.s32.totalorder %s25, 1
      %p151 = por %p149, %p150
      %p153 = scmp.ne.s32.totalorder %s138, %s152
      %p154 = scmp.eq.s32.totalorder %s25, 0
      %p155 = por %p153, %p154
      %s156 = ssub.s32 %s26, %s38
      %s157 = ssub.s32 %s27, %s34
      %s158 = sor.u32 %s156, %s157
      %p159 = scmp.eq.s32.totalorder %s158, 0
      %s161 = sadd.s32 %s160, 1
      %s162 = scalar_select %p159, %s160, %s161
      %p165 = pneg %p159
      %p166 = scmp.eq.s32.totalorder %s19, 1
      %p167 = por %p165, %p166
      %p168 = scmp.ne.s32.totalorder %s160, %s163
      %p169 = scmp.eq.s32.totalorder %s19, 0
      %p170 = por %p168, %p169
      %p171 = scmp.ne.s32.totalorder %s160, %s163
      %p172 = scmp.eq.s32.totalorder %s24, 1
      %p173 = por %p171, %p172
      %p174 = scmp.ne.s32.totalorder %s163, %s164
      %p175 = scmp.eq.s32.totalorder %s24, 0
      %p176 = por %p174, %p175
      %p177 = scmp.ne.s32.totalorder %s163, %s164
      %p178 = scmp.eq.s32.totalorder %s25, 1
      %p179 = por %p177, %p178
      %p181 = scmp.ne.s32.totalorder %s164, %s180
      %p182 = scmp.eq.s32.totalorder %s25, 0
      %p183 = por %p181, %p182
      %p184 = scmp.le.s32.totalorder 1, %s19
      %p185 = scmp.lt.s32.totalorder %s19, 3
      %p186 = pnand %p184, %p185
      %p187 = pneg %p186
      // Predicated region
      $region9: #{_s2t_call.1} parent=5 // pred_check
        _
      $region10: #{_s2t_call.1} parent=5 // pred_check_branch
        %189 = sbr.rel (%p186) target = $region12
      $region11: #{_s2t_call.1} parent=5 // pred_region
        %s190 = ssub.s32 %s19, 1
        // Predicated region
        $region13: #{_s2t_call.1} parent=11 // pred_check
          %p191 = pneg %p106
        $region14: #{_s2t_call.1} parent=11 // pred_check_branch
          %193 = sbr.rel (%p191) target = $region16
        $region15: #{_s2t_call.1} parent=11 // pred_region
          %195 = vsyncadd [#allocation7], 0
          %s196 = sshll.u32 %s2, 4
          %s197 = int_to_ptr.hbm [resolvable:$true] %s196
          %s198 = sshll.u32 [#allocation6], 4
          %s199 = int_to_ptr.vmem [resolvable:$true] %s198
          %204 = dma.hbm_to_vmem [thread:$0]  %s197, 256, %s199, [#allocation7], 64, 64, 4
        $region16: #{_s2t_call.1} parent=11 // pred_fallthru
          _
        // Predicated region
        $region17: #{_s2t_call.1} parent=11 // pred_check
          %p205 = pneg %p127
        $region18: #{_s2t_call.1} parent=11 // pred_check_branch
          %207 = sbr.rel (%p205) target = $region20
        $region19: #{_s2t_call.1} parent=11 // pred_region
          %209 = vsyncadd [#allocation7], 0
          %s211 = sshll.u32 %s3, 4
          %s212 = int_to_ptr.hbm [resolvable:$true] %s211
          %s213 = sshll.u32 [#allocation8], 4
          %s214 = int_to_ptr.vmem [resolvable:$true] %s213
          %216 = dma.hbm_to_vmem [thread:$0]  %s212, 128, %s214, [#allocation7]
        $region20: #{_s2t_call.1} parent=11 // pred_fallthru
          _
        // Predicated region
        $region21: #{_s2t_call.1} parent=11 // pred_check
          %p217 = pneg %p148
        $region22: #{_s2t_call.1} parent=11 // pred_check_branch
          %219 = sbr.rel (%p217) target = $region24
        $region23: #{_s2t_call.1} parent=11 // pred_region
          _
        $region24: #{_s2t_call.1} parent=11 // pred_fallthru
          _
      $region12: #{_s2t_call.1} parent=5 // pred_fallthru
        _
      %p220 = scmp.lt.s32.totalorder %s19, 2
      // Predicated region
      $region25: #{_s2t_call.1} parent=5 // pred_check
        %p221 = pneg %p220
      $region26: #{_s2t_call.1} parent=5 // pred_check_branch
        %223 = sbr.rel (%p221) target = $region28
      $region27: #{_s2t_call.1} parent=5 // pred_region
        // Predicated region
        $region29: #{_s2t_call.1} parent=27 // pred_check
          %p224 = pneg %p53
        $region30: #{_s2t_call.1} parent=27 // pred_check_branch
          %226 = sbr.rel (%p224) target = $region32
        $region31: #{_s2t_call.1} parent=27 // pred_region
          %s227 = sand.u32 %s43, 1
          %s228 = scalar_lea.sflag [#allocation4], %s227
          %s229 = sand.u32 %s43, 1
          %s230 = smul.addr %s229, 32
          %s231 = scalar_lea.vmem [#allocation3], %s230
          %s232 = smul.u32 8, %s27
          %234 = vsyncadd %s228, 0
          %s235 = smul.addr %s26, 8
          %s236 = sadd.s32 %s232, %s235
          %s237 = smul.addr %s236, 4
          %s238 = scalar_lea.hbm %s0, %s237
          %s239 = sshll.u32 %s238, 4
          %s240 = int_to_ptr.hbm [resolvable:$true] %s239
          %s241 = sshll.u32 %s231, 4
          %s242 = int_to_ptr.vmem [resolvable:$true] %s241
          %247 = dma.hbm_to_vmem [thread:$0]  %s240, 512, %s242, %s228, 64, 64, 4
        $region32: #{_s2t_call.1} parent=27 // pred_fallthru
          _
        // Predicated region
        $region33: #{_s2t_call.1} parent=27 // pred_check
          %p248 = pneg %p79
        $region34: #{_s2t_call.1} parent=27 // pred_check_branch
          %250 = sbr.rel (%p248) target = $region36
        $region35: #{_s2t_call.1} parent=27 // pred_region
          %p251 = scmp.lt.s32.totalorder %s26, 1
          %s252 = scalar_select %p251, %s26, 1
          %s253 = scalar_lea.vmem %s1, %s252
        $region36: #{_s2t_call.1} parent=27 // pred_fallthru
          _
      $region28: #{_s2t_call.1} parent=5 // pred_fallthru
        _
      %p254 = scmp.le.s32.totalorder 1, %s19
      %p255 = scmp.lt.s32.totalorder %s19, 3
      %p256 = pnand %p254, %p255
      %p257 = pneg %p256
      // Predicated region
      $region37: #{_s2t_call.1} parent=5 // pred_check
        _
      $region38: #{_s2t_call.1} parent=5 // pred_check_branch
        %259 = sbr.rel (%p256) target = $region40
      $region39: #{_s2t_call.1} parent=5 // pred_region
        %s260 = ssub.s32 %s19, 1
        %s261 = sand.u32 %s46, 1
        %s262 = scalar_lea.sflag [#allocation4], %s261
        %s263 = sand.u32 %s46, 1
        %s264 = smul.addr %s263, 32
        %s265 = scalar_lea.vmem [#allocation3], %s264
        // Predicated region
        $region41: #{_s2t_call.1} parent=39 // pred_check
          %p266 = pneg %p59
        $region42: #{_s2t_call.1} parent=39 // pred_check_branch
          %268 = sbr.rel (%p266) target = $region44
        $region43: #{_s2t_call.1} parent=39 // pred_region
          %270 = dma.done %s262, 512
        $region44: #{_s2t_call.1} parent=39 // pred_fallthru
          _
        // Predicated region
        $region45: #{_s2t_call.1} parent=39 // pred_check
          %p271 = pneg %p106
        $region46: #{_s2t_call.1} parent=39 // pred_check_branch
          %273 = sbr.rel (%p271) target = $region48
        $region47: #{_s2t_call.1} parent=39 // pred_region
          %275 = dma.done [#allocation7], 256
        $region48: #{_s2t_call.1} parent=39 // pred_fallthru
          _
        // Predicated region
        $region49: #{_s2t_call.1} parent=39 // pred_check
          %p276 = pneg %p127
        $region50: #{_s2t_call.1} parent=39 // pred_check_branch
          %278 = sbr.rel (%p276) target = $region52
        $region51: #{_s2t_call.1} parent=39 // pred_region
          %280 = dma.done [#allocation7], 128
        $region52: #{_s2t_call.1} parent=39 // pred_fallthru
          _
        %s281 = sand.u32 %s46, 1
        %s282 = scalar_lea.sflag [#allocation4], %s281
        %s283 = sand.u32 %s46, 1
        %s284 = smul.addr %s283, 32
        %s285 = scalar_lea.vmem [#allocation3], %s284
        %p286 = pneg %p59
        %p287 = pneg %p56
        %p288 = scmp.lt.s32.totalorder %s28, 1
        %s289 = scalar_select %p288, %s28, 1
        %s290 = scalar_lea.vmem %s1, %s289
        %p291 = pneg %p85
        %p292 = pneg %p82
        %p293 = pneg %p106
        %p294 = pneg %p103
        %p295 = pneg %p127
        %p296 = pneg %p124
        %p297 = pneg %p148
        %p298 = pneg %p145
        %p299 = pneg %p176
        %p300 = pneg %p173
        %s301 = sand.u32 %s163, 1
        %s302 = scalar_lea.sflag [#allocation5], %s301
        %s303 = sand.u32 %s163, 1
        %s304 = smul.addr %s303, 8
        %s305 = scalar_lea.vmem [#allocation9], %s304
        %s306 = smul.u32 8, %s29
        %p307 = scmp.lt.s32.totalorder %s28, 1
        %s308 = scalar_select %p307, %s28, 1
        %s309 = scalar_lea.vmem %s1, %s308
        %v311 = vld [vmem:[#allocation8] sm:$0xff]
        %v312 = vld [vmem:[%s265] sm:$0xf]
        %v313 = vld [vmem:[%s265 + $0x4] sm:$0xf]
        %v314 = vld [vmem:[%s265 + $0x8] sm:$0xf]
        %v315 = vld [vmem:[%s265 + $0xc] sm:$0xf]
        %v316 = vld [vmem:[%s265 + $0x10] sm:$0xf]
        %v317 = vld [vmem:[%s265 + $0x14] sm:$0xf]
        %v318 = vld [vmem:[%s265 + $0x18] sm:$0xf]
        %v319 = vld [vmem:[%s265 + $0x1c] sm:$0xf]
        %v320 = vld [vmem:[#allocation6] sm:$0xf]
        %v321 = vld [vmem:[#allocation6 + $0x4] sm:$0xf]
        %v322 = vld [vmem:[#allocation6 + $0x8] sm:$0xf]
        %v323 = vld [vmem:[#allocation6 + $0xc] sm:$0xf]
        %v324 = vperm.slane %v311, 0
        %v333 = vunpack.c.l.b16 %v312
        %v334 = vunpack.c.l.b16 %v313
        %v335 = vunpack.c.l.b16 %v314
        %v336 = vunpack.c.l.b16 %v315
        %v337 = vunpack.c.l.b16 %v316
        %v338 = vunpack.c.l.b16 %v317
        %v339 = vunpack.c.l.b16 %v318
        %v340 = vunpack.c.l.b16 %v319
        %v341 = vpack.c.b16 %v334, %v333
        %v342 = vpack.c.b16 %v336, %v335
        %v343 = vpack.c.b16 %v338, %v337
        %v344 = vpack.c.b16 %v340, %v339
        %v349 = vunpack.c.l.b16 %v320
        %v350 = vunpack.c.l.b16 %v321
        %v351 = vunpack.c.l.b16 %v322
        %v352 = vunpack.c.l.b16 %v323
        %v353 = vpack.c.b16 %v350, %v349
        %v354 = vpack.c.b16 %v352, %v351
        %vm357 = vcmask 261120
        %v359 = vsel %vm357, %v341, 0
        %v362 = vsel %vm357, %v342, 0
        %v365 = vsel %vm357, %v343, 0
        %v368 = vsel %vm357, %v344, 0
        %370 = vmatpush.bf16.msra.mxu0 0
        %371 = vmatpush.bf16.msra.mxu0 0
        %372 = vmatpush.bf16.msra.mxu0 0
        %373 = vmatpush.bf16.msra.mxu0 0
        %374 = vmatpush.bf16.msra.mxu0 0
        %375 = vmatpush.bf16.msra.mxu0 0
        %376 = vmatpush.bf16.msra.mxu0 %v354
        %377 = vmatpush.bf16.msra.mxu0 %v353
        %378 = vmatmul.bf16.gmra.mxu0 %v359
        %v379 = vpop.f32.mrf.mxu0
        %v380 = vadd.f32 %v324, %v379
        %v381 = vpop.f32.mrf.mxu0
        %v382 = vadd.f32 %v324, %v381
        %383 = vmatmul.bf16.gmra.mxu0 %v362
        %v384 = vpop.f32.mrf.mxu0
        %v385 = vadd.f32 %v324, %v384
        %v386 = vpop.f32.mrf.mxu0
        %v387 = vadd.f32 %v324, %v386
        %388 = vmatmul.bf16.gmra.mxu0 %v365
        %v389 = vpop.f32.mrf.mxu0
        %v390 = vadd.f32 %v324, %v389
        %v391 = vpop.f32.mrf.mxu0
        %v392 = vadd.f32 %v324, %v391
        %393 = vmatmul.bf16.gmra.mxu0 %v368
        %v394 = vpop.f32.mrf.mxu0
        %v395 = vadd.f32 %v324, %v394
        %v396 = vpop.f32.mrf.mxu0
        %v397 = vadd.f32 %v324, %v396
        %398 = vdwg.mxu0
        %399 = vadd.xlane.f32.xlu0 %v380
        %v400 = vpop.xlane.xlu0 %399
        %401 = vadd.xlane.f32.xlu0 %v382
        %v402 = vpop.xlane.xlu0 %401
        %403 = vadd.xlane.f32.xlu0 %v385
        %v404 = vpop.xlane.xlu0 %403
        %405 = vadd.xlane.f32.xlu0 %v387
        %v406 = vpop.xlane.xlu0 %405
        %407 = vadd.xlane.f32.xlu0 %v390
        %v408 = vpop.xlane.xlu0 %407
        %409 = vadd.xlane.f32.xlu0 %v392
        %v410 = vpop.xlane.xlu0 %409
        %411 = vadd.xlane.f32.xlu0 %v395
        %v412 = vpop.xlane.xlu0 %411
        %413 = vadd.xlane.f32.xlu0 %v397
        %v414 = vpop.xlane.xlu0 %413
        %v415 = vmul.f32 %v400, 0.0078125
        %v416 = vmul.f32 %v402, 0.0078125
        %v417 = vmul.f32 %v404, 0.0078125
        %v418 = vmul.f32 %v406, 0.0078125
        %v419 = vmul.f32 %v408, 0.0078125
        %v420 = vmul.f32 %v410, 0.0078125
        %v421 = vmul.f32 %v412, 0.0078125
        %v422 = vmul.f32 %v414, 0.0078125
        %v423 = vmul.f32 %v380, %v380
        %v424 = vmul.f32 %v382, %v382
        %v425 = vmul.f32 %v385, %v385
        %v426 = vmul.f32 %v387, %v387
        %v427 = vmul.f32 %v390, %v390
        %v428 = vmul.f32 %v392, %v392
        %v429 = vmul.f32 %v395, %v395
        %v430 = vmul.f32 %v397, %v397
        %431 = vadd.xlane.f32.xlu0 %v423
        %v432 = vpop.xlane.xlu0 %431
        %433 = vadd.xlane.f32.xlu0 %v424
        %v434 = vpop.xlane.xlu0 %433
        %435 = vadd.xlane.f32.xlu0 %v425
        %v436 = vpop.xlane.xlu0 %435
        %437 = vadd.xlane.f32.xlu0 %v426
        %v438 = vpop.xlane.xlu0 %437
        %439 = vadd.xlane.f32.xlu0 %v427
        %v440 = vpop.xlane.xlu0 %439
        %441 = vadd.xlane.f32.xlu0 %v428
        %v442 = vpop.xlane.xlu0 %441
        %443 = vadd.xlane.f32.xlu0 %v429
        %v444 = vpop.xlane.xlu0 %443
        %445 = vadd.xlane.f32.xlu0 %v430
        %v446 = vpop.xlane.xlu0 %445
        %v447 = vmul.f32 %v432, 0.0078125
        %v448 = vmul.f32 %v434, 0.0078125
        %v449 = vmul.f32 %v436, 0.0078125
        %v450 = vmul.f32 %v438, 0.0078125
        %v451 = vmul.f32 %v440, 0.0078125
        %v452 = vmul.f32 %v442, 0.0078125
        %v453 = vmul.f32 %v444, 0.0078125
        %v454 = vmul.f32 %v446, 0.0078125
        %v455 = vmul.f32 %v415, %v415
        %v456 = vmul.f32 %v416, %v416
        %v457 = vmul.f32 %v417, %v417
        %v458 = vmul.f32 %v418, %v418
        %v459 = vmul.f32 %v419, %v419
        %v460 = vmul.f32 %v420, %v420
        %v461 = vmul.f32 %v421, %v421
        %v462 = vmul.f32 %v422, %v422
        %v463 = vsub.f32 %v447, %v455
        %v464 = vsub.f32 %v448, %v456
        %v465 = vsub.f32 %v449, %v457
        %v466 = vsub.f32 %v450, %v458
        %v467 = vsub.f32 %v451, %v459
        %v468 = vsub.f32 %v452, %v460
        %v469 = vsub.f32 %v453, %v461
        %v470 = vsub.f32 %v454, %v462
        %v471 = vadd.f32 %v463, 1e-05
        %v472 = vadd.f32 %v464, 1e-05
        %v473 = vadd.f32 %v465, 1e-05
        %v474 = vadd.f32 %v466, 1e-05
        %v475 = vadd.f32 %v467, 1e-05
        %v476 = vadd.f32 %v468, 1e-05
        %v477 = vadd.f32 %v469, 1e-05
        %v478 = vadd.f32 %v470, 1e-05
        %v479 = vrsqrt.pop %v471
        %v480 = vmul.f32 %v479, %v471
        %v481 = vmul.f32 %v480, %v479
        %v482 = vmul.f32 0.5, %v481
        %v483 = vsub.f32 1.5, %v482
        %v484 = vmul.f32 %v479, %v483
        %vm485 = vweird.f32 %v471
        %vm486 = vweird.f32 %v479
        %vm487 = vmor %vm485, %vm486
        %v488 = vsel %vm487, %v479, %v484
        %v489 = vrsqrt.pop %v472
        %v490 = vmul.f32 %v489, %v472
        %v491 = vmul.f32 %v490, %v489
        %v492 = vmul.f32 0.5, %v491
        %v493 = vsub.f32 1.5, %v492
        %v494 = vmul.f32 %v489, %v493
        %vm495 = vweird.f32 %v472
        %vm496 = vweird.f32 %v489
        %vm497 = vmor %vm495, %vm496
        %v498 = vsel %vm497, %v489, %v494
        %v499 = vrsqrt.pop %v473
        %v500 = vmul.f32 %v499, %v473
        %v501 = vmul.f32 %v500, %v499
        %v502 = vmul.f32 0.5, %v501
        %v503 = vsub.f32 1.5, %v502
        %v504 = vmul.f32 %v499, %v503
        %vm505 = vweird.f32 %v473
        %vm506 = vweird.f32 %v499
        %vm507 = vmor %vm505, %vm506
        %v508 = vsel %vm507, %v499, %v504
        %v509 = vrsqrt.pop %v474
        %v510 = vmul.f32 %v509, %v474
        %v511 = vmul.f32 %v510, %v509
        %v512 = vmul.f32 0.5, %v511
        %v513 = vsub.f32 1.5, %v512
        %v514 = vmul.f32 %v509, %v513
        %vm515 = vweird.f32 %v474
        %vm516 = vweird.f32 %v509
        %vm517 = vmor %vm515, %vm516
        %v518 = vsel %vm517, %v509, %v514
        %v519 = vrsqrt.pop %v475
        %v520 = vmul.f32 %v519, %v475
        %v521 = vmul.f32 %v520, %v519
        %v522 = vmul.f32 0.5, %v521
        %v523 = vsub.f32 1.5, %v522
        %v524 = vmul.f32 %v519, %v523
        %vm525 = vweird.f32 %v475
        %vm526 = vweird.f32 %v519
        %vm527 = vmor %vm525, %vm526
        %v528 = vsel %vm527, %v519, %v524
        %v529 = vrsqrt.pop %v476
        %v530 = vmul.f32 %v529, %v476
        %v531 = vmul.f32 %v530, %v529
        %v532 = vmul.f32 0.5, %v531
        %v533 = vsub.f32 1.5, %v532
        %v534 = vmul.f32 %v529, %v533
        %vm535 = vweird.f32 %v476
        %vm536 = vweird.f32 %v529
        %vm537 = vmor %vm535, %vm536
        %v538 = vsel %vm537, %v529, %v534
        %v539 = vrsqrt.pop %v477
        %v540 = vmul.f32 %v539, %v477
        %v541 = vmul.f32 %v540, %v539
        %v542 = vmul.f32 0.5, %v541
        %v543 = vsub.f32 1.5, %v542
        %v544 = vmul.f32 %v539, %v543
        %vm545 = vweird.f32 %v477
        %vm546 = vweird.f32 %v539
        %vm547 = vmor %vm545, %vm546
        %v548 = vsel %vm547, %v539, %v544
        %v549 = vrsqrt.pop %v478
        %v550 = vmul.f32 %v549, %v478
        %v551 = vmul.f32 %v550, %v549
        %v552 = vmul.f32 0.5, %v551
        %v553 = vsub.f32 1.5, %v552
        %v554 = vmul.f32 %v549, %v553
        %vm555 = vweird.f32 %v478
        %vm556 = vweird.f32 %v549
        %vm557 = vmor %vm555, %vm556
        %v558 = vsel %vm557, %v549, %v554
        %v559 = vsub.f32 %v380, %v415
        %v560 = vsub.f32 %v382, %v416
        %v561 = vsub.f32 %v385, %v417
        %v562 = vsub.f32 %v387, %v418
        %v563 = vsub.f32 %v390, %v419
        %v564 = vsub.f32 %v392, %v420
        %v565 = vsub.f32 %v395, %v421
        %v566 = vsub.f32 %v397, %v422
        %v567 = vmul.f32 %v559, %v488
        %v568 = vmul.f32 %v560, %v498
        %v569 = vmul.f32 %v561, %v508
        %v570 = vmul.f32 %v562, %v518
        %v571 = vmul.f32 %v563, %v528
        %v572 = vmul.f32 %v564, %v538
        %v573 = vmul.f32 %v565, %v548
        %v574 = vmul.f32 %v566, %v558
        %v575 = vperm.slane %v311, 1
        %v576 = vmul.f32 %v567, %v575
        %v577 = vmul.f32 %v568, %v575
        %v578 = vmul.f32 %v569, %v575
        %v579 = vmul.f32 %v570, %v575
        %v580 = vmul.f32 %v571, %v575
        %v581 = vmul.f32 %v572, %v575
        %v582 = vmul.f32 %v573, %v575
        %v583 = vmul.f32 %v574, %v575
        %v584 = vperm.slane %v311, 2
        %v585 = vadd.f32 %v576, %v584
        %v586 = vadd.f32 %v577, %v584
        %v587 = vadd.f32 %v578, %v584
        %v588 = vadd.f32 %v579, %v584
        %v589 = vadd.f32 %v580, %v584
        %v590 = vadd.f32 %v581, %v584
        %v591 = vadd.f32 %v582, %v584
        %v592 = vadd.f32 %v583, %v584
        %v593 = vtanh.pop %v585
        %v594 = vtanh.pop %v586
        %v595 = vtanh.pop %v587
        %v596 = vtanh.pop %v588
        %v597 = vtanh.pop %v589
        %v598 = vtanh.pop %v590
        %v599 = vtanh.pop %v591
        %v600 = vtanh.pop %v592
        %v601 = vperm.slane %v311, 3
        %v602 = vmul.f32 %v593, %v601
        %v603 = vmul.f32 %v594, %v601
        %v604 = vmul.f32 %v595, %v601
        %v605 = vmul.f32 %v596, %v601
        %v606 = vmul.f32 %v597, %v601
        %v607 = vmul.f32 %v598, %v601
        %v608 = vmul.f32 %v599, %v601
        %v609 = vmul.f32 %v600, %v601
        %610 = vadd.xlane.f32.xlu0 %v602
        %v611 = vpop.xlane.xlu0 %610
        %612 = vadd.xlane.f32.xlu0 %v603
        %v613 = vpop.xlane.xlu0 %612
        %614 = vadd.xlane.f32.xlu0 %v604
        %v615 = vpop.xlane.xlu0 %614
        %616 = vadd.xlane.f32.xlu0 %v605
        %v617 = vpop.xlane.xlu0 %616
        %618 = vadd.xlane.f32.xlu0 %v606
        %v619 = vpop.xlane.xlu0 %618
        %620 = vadd.xlane.f32.xlu0 %v607
        %v621 = vpop.xlane.xlu0 %620
        %622 = vadd.xlane.f32.xlu0 %v608
        %v623 = vpop.xlane.xlu0 %622
        %624 = vadd.xlane.f32.xlu0 %v609
        %v625 = vpop.xlane.xlu0 %624
        %s626 = sld [smem:[#allocation2]]
        %v627 = vstv %s626
        %v628 = vadd.f32 %v611, %v627
        %v629 = vadd.f32 %v613, %v627
        %v630 = vadd.f32 %v615, %v627
        %v631 = vadd.f32 %v617, %v627
        %v632 = vadd.f32 %v619, %v627
        %v633 = vadd.f32 %v621, %v627
        %v634 = vadd.f32 %v623, %v627
        %v635 = vadd.f32 %v625, %v627
        %v636 = vld [vmem:[%s309] sm:$0x1]
        %v638 = vperm.slane %v636, 0
        %v639 = vlaneseq
        %v640 = vshrl.u32 %v639, 7
        %642 = vset.pattern.permute.xlu0 %v640
        %643 = vperm.xlu0 %642, %v638
        %v644 = vpop.permute.xlu0 %643
        %v646 = vadd.f32 %v628, %v644
        %v647 = vadd.f32 %v629, %v644
        %v648 = vadd.f32 %v630, %v644
        %v649 = vadd.f32 %v631, %v644
        %v650 = vadd.f32 %v632, %v644
        %v651 = vadd.f32 %v633, %v644
        %v652 = vadd.f32 %v634, %v644
        %v653 = vadd.f32 %v635, %v644
        %662 = vset.pattern.permute.xlu0 0
        %663 = vperm.xlu0 %662, %v646
        %v664 = vpop.permute.xlu0 %663
        %665 = vset.pattern.permute.xlu0 0
        %666 = vperm.xlu0 %665, %v647
        %v667 = vpop.permute.xlu0 %666
        %668 = vset.pattern.permute.xlu0 0
        %669 = vperm.xlu0 %668, %v648
        %v670 = vpop.permute.xlu0 %669
        %671 = vset.pattern.permute.xlu0 0
        %672 = vperm.xlu0 %671, %v649
        %v673 = vpop.permute.xlu0 %672
        %674 = vset.pattern.permute.xlu0 0
        %675 = vperm.xlu0 %674, %v650
        %v676 = vpop.permute.xlu0 %675
        %677 = vset.pattern.permute.xlu0 0
        %678 = vperm.xlu0 %677, %v651
        %v679 = vpop.permute.xlu0 %678
        %680 = vset.pattern.permute.xlu0 0
        %681 = vperm.xlu0 %680, %v652
        %v682 = vpop.permute.xlu0 %681
        %683 = vset.pattern.permute.xlu0 0
        %684 = vperm.xlu0 %683, %v653
        %v685 = vpop.permute.xlu0 %684
        %v686 = vlaneseq
        %v687 = vand.u32 %v686, 127
        %v688 = vperm.slane %v664, %v687
        %v689 = vperm.slane %v667, %v687
        %v690 = vperm.slane %v670, %v687
        %v691 = vperm.slane %v673, %v687
        %v692 = vperm.slane %v676, %v687
        %v693 = vperm.slane %v679, %v687
        %v694 = vperm.slane %v682, %v687
        %v695 = vperm.slane %v685, %v687
        %vm696 = vcmask 1041409
        %v697 = vsel %vm696, %v689, %v688
        %vm698 = vcmask 1042434
        %v699 = vsel %vm698, %v690, %v697
        %vm700 = vcmask 1043459
        %v701 = vsel %vm700, %v691, %v699
        %vm702 = vcmask 1044484
        %v703 = vsel %vm702, %v692, %v701
        %vm704 = vcmask 1045509
        %v705 = vsel %vm704, %v693, %v703
        %vm706 = vcmask 1046534
        %v707 = vsel %vm706, %v694, %v705
        %vm708 = vcmask 1047559
        %v709 = vsel %vm708, %v695, %v707
        %vm711 = vcmask 64512
        %v712 = vsel %vm711, %v709, -inf
        %713 = vmax.xlane.f32.xlu0 %v712
        %v714 = vpop.xlane.xlu0 %713
        %v716 = vperm.slane %v714, 0
        %v717 = vperm.slane %v714, 1
        %v718 = vperm.slane %v714, 2
        %v719 = vperm.slane %v714, 3
        %v720 = vperm.slane %v714, 4
        %v721 = vperm.slane %v714, 5
        %v722 = vperm.slane %v714, 6
        %v723 = vperm.slane %v714, 7
        %v732 = vsub.f32 %v646, %v716
        %v733 = vsub.f32 %v647, %v717
        %v734 = vsub.f32 %v648, %v718
        %v735 = vsub.f32 %v649, %v719
        %v736 = vsub.f32 %v650, %v720
        %v737 = vsub.f32 %v651, %v721
        %v738 = vsub.f32 %v652, %v722
        %v739 = vsub.f32 %v653, %v723
        %v740 = vmul.f32 %v732, 1.442695
        %v741 = vpow.pop %v740
        %v742 = vmul.f32 %v733, 1.442695
        %v743 = vpow.pop %v742
        %v744 = vmul.f32 %v734, 1.442695
        %v745 = vpow.pop %v744
        %v746 = vmul.f32 %v735, 1.442695
        %v747 = vpow.pop %v746
        %v748 = vmul.f32 %v736, 1.442695
        %v749 = vpow.pop %v748
        %v750 = vmul.f32 %v737, 1.442695
        %v751 = vpow.pop %v750
        %v752 = vmul.f32 %v738, 1.442695
        %v753 = vpow.pop %v752
        %v754 = vmul.f32 %v739, 1.442695
        %v755 = vpow.pop %v754
        %764 = vset.pattern.permute.xlu0 0
        %765 = vperm.xlu0 %764, %v741
        %v766 = vpop.permute.xlu0 %765
        %767 = vset.pattern.permute.xlu0 0
        %768 = vperm.xlu0 %767, %v743
        %v769 = vpop.permute.xlu0 %768
        %770 = vset.pattern.permute.xlu0 0
        %771 = vperm.xlu0 %770, %v745
        %v772 = vpop.permute.xlu0 %771
        %773 = vset.pattern.permute.xlu0 0
        %774 = vperm.xlu0 %773, %v747
        %v775 = vpop.permute.xlu0 %774
        %776 = vset.pattern.permute.xlu0 0
        %777 = vperm.xlu0 %776, %v749
        %v778 = vpop.permute.xlu0 %777
        %779 = vset.pattern.permute.xlu0 0
        %780 = vperm.xlu0 %779, %v751
        %v781 = vpop.permute.xlu0 %780
        %782 = vset.pattern.permute.xlu0 0
        %783 = vperm.xlu0 %782, %v753
        %v784 = vpop.permute.xlu0 %783
        %785 = vset.pattern.permute.xlu0 0
        %786 = vperm.xlu0 %785, %v755
        %v787 = vpop.permute.xlu0 %786
        %v788 = vperm.slane %v766, %v687
        %v789 = vperm.slane %v769, %v687
        %v790 = vperm.slane %v772, %v687
        %v791 = vperm.slane %v775, %v687
        %v792 = vperm.slane %v778, %v687
        %v793 = vperm.slane %v781, %v687
        %v794 = vperm.slane %v784, %v687
        %v795 = vperm.slane %v787, %v687
        %v796 = vsel %vm696, %v789, %v788
        %v797 = vsel %vm698, %v790, %v796
        %v798 = vsel %vm700, %v791, %v797
        %v799 = vsel %vm702, %v792, %v798
        %v800 = vsel %vm704, %v793, %v799
        %v801 = vsel %vm706, %v794, %v800
        %v802 = vsel %vm708, %v795, %v801
        %v804 = vsel %vm711, %v802, 0.0
        %805 = vadd.xlane.f32.xlu0 %v804
        %v806 = vpop.xlane.xlu0 %805
        %v807 = vrcp.pop %v806
        %v809 = vperm.slane %v807, 0
        %v810 = vperm.slane %v807, 1
        %v811 = vperm.slane %v807, 2
        %v812 = vperm.slane %v807, 3
        %v813 = vperm.slane %v807, 4
        %v814 = vperm.slane %v807, 5
        %v815 = vperm.slane %v807, 6
        %v816 = vperm.slane %v807, 7
        %v825 = vmul.f32 %v741, %v809
        %v826 = vmul.f32 %v743, %v810
        %v827 = vmul.f32 %v745, %v811
        %v828 = vmul.f32 %v747, %v812
        %v829 = vmul.f32 %v749, %v813
        %v830 = vmul.f32 %v751, %v814
        %v831 = vmul.f32 %v753, %v815
        %v832 = vmul.f32 %v755, %v816
        %v833 = vunpack.c.l.bf16 %v312
        %v834 = vunpack.c.l.bf16 %v313
        %v835 = vunpack.c.l.bf16 %v314
        %v836 = vunpack.c.l.bf16 %v315
        %v837 = vunpack.c.l.bf16 %v316
        %v838 = vunpack.c.l.bf16 %v317
        %v839 = vunpack.c.l.bf16 %v318
        %v840 = vunpack.c.l.bf16 %v319
        %842 = vset.pattern.permute.xlu0 0
        %843 = vperm.xlu0 %842, %v825
        %v844 = vpop.permute.xlu0 %843
        %847 = vset.pattern.permute.xlu0 0
        %848 = vperm.xlu0 %847, %v826
        %v849 = vpop.permute.xlu0 %848
        %852 = vset.pattern.permute.xlu0 0
        %853 = vperm.xlu0 %852, %v827
        %v854 = vpop.permute.xlu0 %853
        %857 = vset.pattern.permute.xlu0 0
        %858 = vperm.xlu0 %857, %v828
        %v859 = vpop.permute.xlu0 %858
        %862 = vset.pattern.permute.xlu0 0
        %863 = vperm.xlu0 %862, %v829
        %v864 = vpop.permute.xlu0 %863
        %867 = vset.pattern.permute.xlu0 0
        %868 = vperm.xlu0 %867, %v830
        %v869 = vpop.permute.xlu0 %868
        %872 = vset.pattern.permute.xlu0 0
        %873 = vperm.xlu0 %872, %v831
        %v874 = vpop.permute.xlu0 %873
        %877 = vset.pattern.permute.xlu0 0
        %878 = vperm.xlu0 %877, %v832
        %v879 = vpop.permute.xlu0 %878
        %v881 = vmul.f32 %v844, %v833
        %v882 = vmul.f32 %v849, %v834
        %v883 = vmul.f32 %v854, %v835
        %v884 = vmul.f32 %v859, %v836
        %v885 = vmul.f32 %v864, %v837
        %v886 = vmul.f32 %v869, %v838
        %v887 = vmul.f32 %v874, %v839
        %v888 = vmul.f32 %v879, %v840
        %v889 = vsel %vm357, %v881, 0.0
        %v890 = vrot.slane %v889, 4
        %v891 = vadd.f32 %v889, %v890
        %v892 = vrot.slane %v891, 2
        %v893 = vadd.f32 %v891, %v892
        %v894 = vrot.slane %v893, 1
        %v895 = vadd.f32 %v893, %v894
        %v896 = vsel %vm357, %v882, 0.0
        %v897 = vrot.slane %v896, 4
        %v898 = vadd.f32 %v896, %v897
        %v899 = vrot.slane %v898, 2
        %v900 = vadd.f32 %v898, %v899
        %v901 = vrot.slane %v900, 1
        %v902 = vadd.f32 %v900, %v901
        %v903 = vsel %vm357, %v883, 0.0
        %v904 = vrot.slane %v903, 4
        %v905 = vadd.f32 %v903, %v904
        %v906 = vrot.slane %v905, 2
        %v907 = vadd.f32 %v905, %v906
        %v908 = vrot.slane %v907, 1
        %v909 = vadd.f32 %v907, %v908
        %v910 = vsel %vm357, %v884, 0.0
        %v911 = vrot.slane %v910, 4
        %v912 = vadd.f32 %v910, %v911
        %v913 = vrot.slane %v912, 2
        %v914 = vadd.f32 %v912, %v913
        %v915 = vrot.slane %v914, 1
        %v916 = vadd.f32 %v914, %v915
        %v917 = vsel %vm357, %v885, 0.0
        %v918 = vrot.slane %v917, 4
        %v919 = vadd.f32 %v917, %v918
        %v920 = vrot.slane %v919, 2
        %v921 = vadd.f32 %v919, %v920
        %v922 = vrot.slane %v921, 1
        %v923 = vadd.f32 %v921, %v922
        %v924 = vsel %vm357, %v886, 0.0
        %v925 = vrot.slane %v924, 4
        %v926 = vadd.f32 %v924, %v925
        %v927 = vrot.slane %v926, 2
        %v928 = vadd.f32 %v926, %v927
        %v929 = vrot.slane %v928, 1
        %v930 = vadd.f32 %v928, %v929
        %v931 = vsel %vm357, %v887, 0.0
        %v932 = vrot.slane %v931, 4
        %v933 = vadd.f32 %v931, %v932
        %v934 = vrot.slane %v933, 2
        %v935 = vadd.f32 %v933, %v934
        %v936 = vrot.slane %v935, 1
        %v937 = vadd.f32 %v935, %v936
        %v938 = vsel %vm357, %v888, 0.0
        %v939 = vrot.slane %v938, 4
        %v940 = vadd.f32 %v938, %v939
        %v941 = vrot.slane %v940, 2
        %v942 = vadd.f32 %v940, %v941
        %v943 = vrot.slane %v942, 1
        %v944 = vadd.f32 %v942, %v943
        %v953 = vsel %vm696, %v902, %v895
        %v954 = vsel %vm698, %v909, %v953
        %v955 = vsel %vm700, %v916, %v954
        %v956 = vsel %vm702, %v923, %v955
        %v957 = vsel %vm704, %v930, %v956
        %v958 = vsel %vm706, %v937, %v957
        %v959 = vsel %vm708, %v944, %v958
        %v961 = vadd.s32 %v687, 4294967264
        %v962 = vperm.slane %v844, %v961
        %v963 = vperm.slane %v849, %v961
        %v964 = vperm.slane %v854, %v961
        %v965 = vperm.slane %v859, %v961
        %v966 = vperm.slane %v864, %v961
        %v967 = vperm.slane %v869, %v961
        %v968 = vperm.slane %v874, %v961
        %v969 = vperm.slane %v879, %v961
        %v970 = vsel %vm696, %v963, %v962
        %v971 = vsel %vm698, %v964, %v970
        %v972 = vsel %vm700, %v965, %v971
        %v973 = vsel %vm702, %v966, %v972
        %v974 = vsel %vm704, %v967, %v973
        %v975 = vsel %vm706, %v968, %v974
        %v976 = vsel %vm708, %v969, %v975
        %v978 = vsel %vm357, %v959, %v976
        %vm979 = vcmask 326656
        %v980 = vsel %vm979, %v978, 0.0
        %981 = vst [vmem:[%s305] sm:$0xff] %v980
        %s982 = sand.u32 %s163, 1
        %s983 = scalar_lea.sflag [#allocation5], %s982
        %s984 = sand.u32 %s163, 1
        %s985 = smul.addr %s984, 8
        %s986 = scalar_lea.vmem [#allocation9], %s985
        // Predicated region
        $region53: #{_s2t_call.1} parent=39 // pred_check
          %p987 = pneg %p173
        $region54: #{_s2t_call.1} parent=39 // pred_check_branch
          %989 = sbr.rel (%p987) target = $region56
        $region55: #{_s2t_call.1} parent=39 // pred_region
          %991 = vsyncadd %s983, 0
          %s992 = sadd.s32 %s29, %s28
          %s993 = smul.addr %s992, 8
          %s994 = scalar_lea.hbm %s5, %s993
          %s996 = sshll.u32 %s986, 4
          %s997 = int_to_ptr.vmem [resolvable:$true] %s996
          %s998 = sshll.u32 %s994, 4
          %s999 = int_to_ptr.hbm [resolvable:$true] %s998
          %1001 = dma.vmem_to_hbm [thread:$0]  %s997, 128, %s999, %s983
        $region56: #{_s2t_call.1} parent=39 // pred_fallthru
          _
      $region40: #{_s2t_call.1} parent=5 // pred_fallthru
        _
      %p1002 = scmp.le.s32.totalorder 2, %s19
      // Predicated region
      $region57: #{_s2t_call.1} parent=5 // pred_check
        %p1003 = pneg %p1002
      $region58: #{_s2t_call.1} parent=5 // pred_check_branch
        %1005 = sbr.rel (%p1003) target = $region60
      $region59: #{_s2t_call.1} parent=5 // pred_region
        %s1006 = ssub.s32 %s19, 2
        // Predicated region
        $region61: #{_s2t_call.1} parent=59 // pred_check
          %p1007 = pneg %p179
        $region62: #{_s2t_call.1} parent=59 // pred_check_branch
          %1009 = sbr.rel (%p1007) target = $region64
        $region63: #{_s2t_call.1} parent=59 // pred_region
          %s1010 = sand.u32 %s164, 1
          %s1011 = scalar_lea.sflag [#allocation5], %s1010
          %s1012 = sand.u32 %s164, 1
          %s1013 = smul.addr %s1012, 8
          %s1014 = scalar_lea.vmem [#allocation9], %s1013
          %1016 = dma.done %s1011, 128
        $region64: #{_s2t_call.1} parent=59 // pred_fallthru
          _
      $region60: #{_s2t_call.1} parent=5 // pred_fallthru
        _
    $region6: #{_s2t_call.1} parent=1 // loop_footer
      %s23 = sadd.s32 1, %s19
    $region7: #{_s2t_call.1} parent=1 // loop_footer_branch
      %18 = sbr.rel target = $region3
    $region8: #{_s2t_call.1} parent=1 // loop_exit
      _
    %1017 = vsyncpa [#allocation4], 1
    %s1018 = scalar_lea.sflag [#allocation4], 1
    %1019 = vsyncpa %s1018, 1
    %1020 = vsyncpa [#allocation7], 1
    %1021 = vsyncpa [#allocation5], 1
    %s1022 = scalar_lea.sflag [#allocation5], 1
    %1023 = vsyncpa %s1022, 1

</llo_original>
